<compile_context>
chip_gen: v7x
topology: tpu7x:2x2x1
jax: 0.10.0
libtpu: 0.0.40
codegen_flags: <defaults>
</compile_context>

<pallas_src>
import jax
import jax.numpy as jnp
from jax import lax
from jax.experimental import pallas as pl
from jax.experimental.pallas import tpu as pltpu

_LANE = 128
_K_PAD = 8                                   # sublane granule for the fused K dim
_TARGET_OUT_BLOCK_BYTES = 4 * 1024 * 1024    # ~4 MiB output block (roofline plateau)


def _round_up(x, m):
    return ((x + m - 1) // m) * m


def _coord_pe_kernel(coords_ref, w_ref, b_ref, out_ref):
    # coords_ref: [8, TILE_N]  row 0 = lat, row 1 = lon, rows 2..7 = 0 (lane-dense)
    # w_ref:      [8, D]       row 0 = [w_lat | 0], row 1 = [0 | w_lon], rest 0
    # b_ref:      [1, D]       concat(b_lat, b_lon)
    # out_ref:    [TILE_N, D]
    emb = lax.dot_general(
        coords_ref[...], w_ref[...],
        dimension_numbers=(((0,), (0,)), ((), ())),   # lhs-transposed (TN) -> MXU
        preferred_element_type=jnp.float32)            # [TILE_N, D]
    emb = emb + b_ref[...]
    out_ref[...] = jnp.maximum(emb, 0.0).astype(out_ref.dtype)


def _choose_tiling(n, d_model, max_tile_n, out_itemsize):
    """Pick (tile_n, n_padded, grid) with 128-aligned, VMEM-aware tiles."""
    # Clamp/validate user tile to a multiple of 128 (lane dim of the [8, N]
    # coords block must be 128-aligned unless it spans the whole array).
    max_tile = max(_LANE, (int(max_tile_n) // _LANE) * _LANE)
    # Keep the double-buffered output block inside the scoped-VMEM budget.
    vmem_cap = _TARGET_OUT_BLOCK_BYTES // max(1, out_itemsize * d_model)
    vmem_cap = max(_LANE, (vmem_cap // _LANE) * _LANE)
    max_tile = min(max_tile, vmem_cap)
    # >= 2 tiles (when N allows) so "parallel" can shard across v7x's 2 TCs;
    # harmless on single-TC v5e/v6e.
    min_tiles = 1 if n <= _LANE else 2
    num_tiles = max(min_tiles, pl.cdiv(n, max_tile))
    tile_n = min(max_tile, _round_up(pl.cdiv(n, num_tiles), _LANE))
    grid_n = pl.cdiv(n, tile_n)
    return tile_n, grid_n * tile_n, grid_n


def coordinate_positional_encoding(lat, lon, w_lat, b_lat, w_lon, b_lon,
                                   *, max_tile_n=2048, out_dtype=jnp.float32):
    """lat/lon: [N,1]; w_*: [d/2,1] (PyTorch Linear layout); b_*: [d/2]."""
    n = lat.shape[0]
    d_half = w_lat.shape[0]
    d_model = 2 * d_half
    f32 = jnp.float32
    out_itemsize = jnp.dtype(out_dtype).itemsize

    tile_n, n_padded, grid_n = _choose_tiling(n, d_model, max_tile_n, out_itemsize)

    # Lane-dense coords slab [8, n_padded]: row 0 = lat, row 1 = lon, rest 0.
    coords = jnp.zeros((_K_PAD, n_padded), f32)
    coords = coords.at[0, :n].set(lat.reshape(-1).astype(f32))
    coords = coords.at[1, :n].set(lon.reshape(-1).astype(f32))

    # Fused weight [8, d_model]: row 0 = [w_lat, 0], row 1 = [0, w_lon]; fused bias.
    w = jnp.zeros((_K_PAD, d_model), f32)
    w = w.at[0, :d_half].set(w_lat.reshape(-1).astype(f32))
    w = w.at[1, d_half:].set(w_lon.reshape(-1).astype(f32))
    bias = jnp.concatenate(
        [b_lat.reshape(-1), b_lon.reshape(-1)]).astype(f32).reshape(1, d_model)

    # Honest traffic estimate for XLA's scheduler: streamed coords (8 rows),
    # resident weights/bias, plus the dominant output write stream.
    cost = pl.CostEstimate(
        flops=(2 * _K_PAD + 2) * n_padded * d_model,
        transcendentals=0,
        bytes_accessed=(4 * _K_PAD * n_padded
                        + 4 * (_K_PAD + 1) * d_model
                        + out_itemsize * n_padded * d_model),
    )

    # Explicit scoped-VMEM budget: double-buffered out + coords blocks,
    # resident weight/bias, plus headroom.
    out_block = tile_n * d_model * out_itemsize
    in_block = _K_PAD * tile_n * 4
    resident = (_K_PAD + 1) * d_model * 4
    vmem_limit = int(min(max(2 * (out_block + in_block + resident) + (4 << 20),
                             16 << 20), 48 << 20))

    out = pl.pallas_call(
        _coord_pe_kernel,
        out_shape=jax.ShapeDtypeStruct((n_padded, d_model), out_dtype),
        grid=(grid_n,),
        in_specs=[
            pl.BlockSpec((_K_PAD, tile_n), lambda i: (0, i)),    # streamed coords
            pl.BlockSpec((_K_PAD, d_model), lambda i: (0, 0)),   # resident weight
            pl.BlockSpec((1, d_model), lambda i: (0, 0)),        # resident bias
        ],
        out_specs=pl.BlockSpec((tile_n, d_model), lambda i: (i, 0)),
        compiler_params=pltpu.CompilerParams(
            dimension_semantics=("parallel",),
            vmem_limit_bytes=vmem_limit),
        cost_estimate=cost,
    )(coords, w, bias)

    return out[:n] if n_padded != n else out


def _reference(lat, lon, w_lat, b_lat, w_lon, b_lon):
    # Elementwise f32 reference (no dot), matching the PyTorch module exactly.
    lat_enc = lat * w_lat[:, 0][None, :] + b_lat[None, :]
    lon_enc = lon * w_lon[:, 0][None, :] + b_lon[None, :]
    return jnp.maximum(jnp.concatenate([lat_enc, lon_enc], axis=1), 0.0)


def _run_case(key, num_stations, d_model):
    d_half = d_model // 2
    k_lat, k_lon, k_wl, k_bl, k_wo, k_bo = jax.random.split(key, 6)

    lat = jax.random.uniform(k_lat, (num_stations, 1), jnp.float32, -1.0, 1.0)
    lon = jax.random.uniform(k_lon, (num_stations, 1), jnp.float32, -1.0, 1.0)
    w_lat = jax.random.normal(k_wl, (d_half, 1), jnp.float32) * 0.5
    b_lat = jax.random.normal(k_bl, (d_half,), jnp.float32) * 0.1
    w_lon = jax.random.normal(k_wo, (d_half, 1), jnp.float32) * 0.5
    b_lon = jax.random.normal(k_bo, (d_half,), jnp.float32) * 0.1

    # Pre-round test data to bf16-representable values so the f32 reference
    # matches the kernel regardless of the MXU's f32 precision mode
    # (bf16 x bf16 products are exact in f32).
    q = lambda a: a.astype(jnp.bfloat16).astype(jnp.float32)
    lat, lon, w_lat, b_lat, w_lon, b_lon = map(q, (lat, lon, w_lat, b_lat,
                                                   w_lon, b_lon))

    out = coordinate_positional_encoding(lat, lon, w_lat, b_lat, w_lon, b_lon)
    out = jax.block_until_ready(out)

    ref = _reference(lat, lon, w_lat, b_lat, w_lon, b_lon)
    assert out.shape == (num_stations, d_model), out.shape
    assert jnp.allclose(out, ref, atol=1e-5, rtol=1e-5), "mismatch vs reference"


if __name__ == "__main__":
    # Note: at N this tiny, XLA fusion of the reference expression would beat
    # any pallas_call (fixed ~µs launch overhead); the kernel is written for
    # the general large-N case and verified here at small shapes.
    key = jax.random.PRNGKey(0)
    k0, k1, k2 = jax.random.split(key, 3)
    _run_case(k0, num_stations=8, d_model=64)     # tiny, single tile
    _run_case(k1, num_stations=10, d_model=32)    # N-padding + masked-store path
    _run_case(k2, num_stations=300, d_model=256)  # multi-tile, lane-dense output
    print("KERNEL_OK")
</pallas_src>

<mosaic_0001>
module attributes {stable_mosaic.version = 11 : i64} {
  func.func @_coord_pe_kernel(%arg0: i32, %arg1: memref<8x128xf32, #tpu.memory_space<vmem>>, %arg2: memref<8x64xf32, #tpu.memory_space<vmem>>, %arg3: memref<1x64xf32, #tpu.memory_space<vmem>>, %arg4: memref<128x64xf32, #tpu.memory_space<vmem>>) attributes {dimension_semantics = [#tpu.dimension_semantics<parallel>], iteration_bounds = array<i64: 1>, scalar_prefetch = 0 : i64, scratch_operands = 0 : i64, tpu.core_type = #tpu.core_type<tc>, window_params = [{transform_indices = @transform_0, window_bounds = array<i64: 8, 128>}, {pipeline_mode = #tpu.pipeline_mode<synchronous>, transform_indices = @transform_1, window_bounds = array<i64: 8, 64>}, {pipeline_mode = #tpu.pipeline_mode<synchronous>, transform_indices = @transform_2, window_bounds = array<i64: 1, 64>}, {transform_indices = @transform_3, window_bounds = array<i64: 128, 64>}]} {
    %c0 = arith.constant 0 : index
    %c0_0 = arith.constant 0 : index
    %0 = vector.load %arg1[%c0, %c0_0] : memref<8x128xf32, #tpu.memory_space<vmem>>, vector<8x128xf32>
    %c0_1 = arith.constant 0 : index
    %c0_2 = arith.constant 0 : index
    %1 = vector.load %arg2[%c0_1, %c0_2] : memref<8x64xf32, #tpu.memory_space<vmem>>, vector<8x64xf32>
    %cst = arith.constant dense<0.000000e+00> : vector<128x64xf32>
    %2 = tpu.matmul %0, %1, %cst {dimension_numbers = #tpu.dot_dimension_numbers<[0], [0], [1], [1], [0, 1, 1, 1], [], []>} : vector<8x128xf32>, vector<8x64xf32>, vector<128x64xf32> -> vector<128x64xf32>
    %c0_3 = arith.constant 0 : index
    %c0_4 = arith.constant 0 : index
    %3 = vector.load %arg3[%c0_3, %c0_4] : memref<1x64xf32, #tpu.memory_space<vmem>>, vector<1x64xf32>
    %4 = vector.broadcast %3 : vector<1x64xf32> to vector<128x64xf32>
    %5 = arith.addf %2, %4 : vector<128x64xf32>
    %cst_5 = arith.constant 0.000000e+00 : f32
    %6 = vector.broadcast %cst_5 : f32 to vector<128x64xf32>
    %7 = arith.maximumf %5, %6 : vector<128x64xf32>
    %c0_6 = arith.constant 0 : index
    %c0_7 = arith.constant 0 : index
    %8 = vector.load %arg4[%c0_6, %c0_7] : memref<128x64xf32, #tpu.memory_space<vmem>>, vector<128x64xf32>
    tpu.vector_store %arg4[%c0_6, %c0_7], %7 {strides = array<i32>} : memref<128x64xf32, #tpu.memory_space<vmem>>, vector<128x64xf32>,
    return
  }
  func.func @transform_0(%arg0: i32) -> (i32, i32) {
    %c0_i32 = arith.constant 0 : i32
    %c0_i32_0 = arith.constant 0 : i32
    return %c0_i32, %arg0 : i32, i32
  }
  func.func @transform_1(%arg0: i32) -> (i32, i32) {
    %c0_i32 = arith.constant 0 : i32
    %c0_i32_0 = arith.constant 0 : i32
    %c0_i32_1 = arith.constant 0 : i32
    return %c0_i32, %c0_i32_0 : i32, i32
  }
  func.func @transform_2(%arg0: i32) -> (i32, i32) {
    %c0_i32 = arith.constant 0 : i32
    %c0_i32_0 = arith.constant 0 : i32
    %c0_i32_1 = arith.constant 0 : i32
    return %c0_i32, %c0_i32_0 : i32, i32
  }
  func.func @transform_3(%arg0: i32) -> (i32, i32) {
    %c0_i32 = arith.constant 0 : i32
    %c0_i32_0 = arith.constant 0 : i32
    return %arg0, %c0_i32 : i32, i32
  }
}

</mosaic_0001>

<llo_original>
// kernel: tpu_custom_call.1
$region0: #{tpu_custom_call.1}
  #allocation0 [shape = 'u32[]', space=smem, size = 0x4, offset = 0x4, fixed_abs, tag = 'smem constant byte address 0x4 - core index']
  #allocation1 [shape = 'u32[144,128]{1,0:T(1,128)}', space=vmem, size = 0x12000, scoped, tag = 'internal scratch']
  %s0 = inlined_call_operand.hbm [shape: f32[8,128], index: 0, kind: input, shape index: {}]
  %s1 = inlined_call_operand.hbm [shape: f32[8,64], index: 1, kind: input, shape index: {}]
  %s2 = inlined_call_operand.vmem [shape: f32[1,64], index: 2, kind: input, shape index: {}]
  %s3 = inlined_call_operand.vmem [shape: f32[128,64], index: 3, kind: output, shape index: {}]
  %s4 = sld [smem:[#allocation0]]
  $region30: #{tpu_custom_call.1} parent=0
    _
  %s6 = ssub.s32 1, %s4
  %s7 = scalar_select 0, %s6, %s4
  $region1: #{tpu_custom_call.1} parent=0
    #allocation2 [shape = 'u8[4096]{0}', space=vmem, size = 0x1000, scoped, tag = 'input window, operand 0, single buffered']
    #allocation3 [shape = 's32[1]{0}', space=sflag, size = 0x4, scoped, tag = 'scoped memory for tpu_custom_call.1']
    #allocation4 [shape = 'u8[4096]{0}', space=vmem, size = 0x1000, scoped, tag = 'input window, operand 1, single buffered']
    #allocation5 [shape = 's32[1]{0}', space=sflag, size = 0x4, scoped, tag = 'scoped memory for tpu_custom_call.1']
    %8 = vsyncpa [#allocation3], 0
    %9 = vsyncpa [#allocation5], 0
    // Predicated region
    $region2: #{tpu_custom_call.1} parent=1 // pred_check
      _
    $region3: #{tpu_custom_call.1} parent=1 // pred_check_branch
      %11 = sbr.rel (0) target = $region5
    $region4: #{tpu_custom_call.1} parent=1 // pred_region
      %s13 = ssub.s32 128, 128
      %14 = vsyncadd [#allocation3], %s13
      %s16 = sshll.u32 [#allocation2], 4
      %s17 = int_to_ptr.vmem [resolvable:$true] %s16
      %19 = dma.hbm_to_vmem [thread:$0]  %s0, 128, %s17, [#allocation3]
    $region5: #{tpu_custom_call.1} parent=1 // pred_fallthru
      _
    // Predicated region
    $region6: #{tpu_custom_call.1} parent=1 // pred_check
      _
    $region7: #{tpu_custom_call.1} parent=1 // pred_check_branch
      %21 = sbr.rel (0) target = $region9
    $region8: #{tpu_custom_call.1} parent=1 // pred_region
      %s23 = ssub.s32 128, 128
      %24 = vsyncadd [#allocation5], %s23
      %s26 = sshll.u32 [#allocation4], 4
      %s27 = int_to_ptr.vmem [resolvable:$true] %s26
      %29 = dma.hbm_to_vmem [thread:$0]  %s1, 128, %s27, [#allocation5]
    $region9: #{tpu_custom_call.1} parent=1 // pred_fallthru
      _
    // Predicated region
    $region10: #{tpu_custom_call.1} parent=1 // pred_check
      _
    $region11: #{tpu_custom_call.1} parent=1 // pred_check_branch
      %31 = sbr.rel (0) target = $region13
    $region12: #{tpu_custom_call.1} parent=1 // pred_region
      _
    $region13: #{tpu_custom_call.1} parent=1 // pred_fallthru
      _
    // Predicated region
    $region14: #{tpu_custom_call.1} parent=1 // pred_check
      _
    $region15: #{tpu_custom_call.1} parent=1 // pred_check_branch
      %33 = sbr.rel (0) target = $region17
    $region16: #{tpu_custom_call.1} parent=1 // pred_region
      %34 = dma.done [#allocation3], 128
    $region17: #{tpu_custom_call.1} parent=1 // pred_fallthru
      _
    // Predicated region
    $region18: #{tpu_custom_call.1} parent=1 // pred_check
      _
    $region19: #{tpu_custom_call.1} parent=1 // pred_check_branch
      %36 = sbr.rel (0) target = $region21
    $region20: #{tpu_custom_call.1} parent=1 // pred_region
      %37 = dma.done [#allocation5], 128
    $region21: #{tpu_custom_call.1} parent=1 // pred_fallthru
      _
    %v38 = vld [vmem:[#allocation2] sm:$0xff]
    %v39 = vld [vmem:[#allocation4] sm:$0xff]
    %v40 = vld [vmem:[%s2] sm:$0x1]
    %v42 = vlaneseq
    %v43 = vshrl.u32 %v42, 7
    %v44 = vsub.s32 0, %v43
    %v45 = vrot.slane %v40, %v44
    %47 = vxpose.xlu0.b32.start [1/16] %v38, 128
    %48 = vxpose.xlu0.b32.cont [2/16] 0.0, 128
    %49 = vxpose.xlu0.b32.cont [3/16] 0.0, 128
    %50 = vxpose.xlu0.b32.cont [4/16] 0.0, 128
    %51 = vxpose.xlu0.b32.cont [5/16] 0.0, 128
    %52 = vxpose.xlu0.b32.cont [6/16] 0.0, 128
    %53 = vxpose.xlu0.b32.cont [7/16] 0.0, 128
    %54 = vxpose.xlu0.b32.cont [8/16] 0.0, 128
    %55 = vxpose.xlu0.b32.cont [9/16] 0.0, 128
    %56 = vxpose.xlu0.b32.cont [10/16] 0.0, 128
    %57 = vxpose.xlu0.b32.cont [11/16] 0.0, 128
    %58 = vxpose.xlu0.b32.cont [12/16] 0.0, 128
    %59 = vxpose.xlu0.b32.cont [13/16] 0.0, 128
    %60 = vxpose.xlu0.b32.cont [14/16] 0.0, 128
    %61 = vxpose.xlu0.b32.cont [15/16] 0.0, 128
    %62 = vxpose.xlu0.b32.end [16/16] 0.0, 128
    %v63 = vpop.trf.xlu0
    %v64 = vpop.trf.xlu0
    %v65 = vpop.trf.xlu0
    %v66 = vpop.trf.xlu0
    %v67 = vpop.trf.xlu0
    %v68 = vpop.trf.xlu0
    %v69 = vpop.trf.xlu0
    %v70 = vpop.trf.xlu0
    %v71 = vpop.trf.xlu0
    %v72 = vpop.trf.xlu0
    %v73 = vpop.trf.xlu0
    %v74 = vpop.trf.xlu0
    %v75 = vpop.trf.xlu0
    %v76 = vpop.trf.xlu0
    %v77 = vpop.trf.xlu0
    %v78 = vpop.trf.xlu0
    %vm79 = vcmask 64512
    %v81 = vsel %vm79, %v63, 0
    %v84 = vsel %vm79, %v64, 0
    %v87 = vsel %vm79, %v65, 0
    %v90 = vsel %vm79, %v66, 0
    %v93 = vsel %vm79, %v67, 0
    %v96 = vsel %vm79, %v68, 0
    %v99 = vsel %vm79, %v69, 0
    %v102 = vsel %vm79, %v70, 0
    %v105 = vsel %vm79, %v71, 0
    %v108 = vsel %vm79, %v72, 0
    %v111 = vsel %vm79, %v73, 0
    %v114 = vsel %vm79, %v74, 0
    %v117 = vsel %vm79, %v75, 0
    %v120 = vsel %vm79, %v76, 0
    %v123 = vsel %vm79, %v77, 0
    %v126 = vsel %vm79, %v78, 0
    %128 = vmatprep.subr.mxu0 0.0
    %129 = vmatpush1.msra.mxu0 %v39
    %130 = vmatprep.subr.mxu0 0.0
    %131 = vmatpush1.msra.mxu0 0.0
    %132 = vmatprep.subr.mxu0 0.0
    %133 = vmatpush1.msra.mxu0 0.0
    %134 = vmatprep.subr.mxu0 0.0
    %135 = vmatpush1.msra.mxu0 0.0
    %136 = vmatprep.subr.mxu0 0.0
    %137 = vmatpush1.msra.mxu0 0.0
    %138 = vmatprep.subr.mxu0 0.0
    %139 = vmatpush1.msra.mxu0 0.0
    %140 = vmatprep.subr.mxu0 0.0
    %141 = vmatpush1.msra.mxu0 0.0
    %142 = vmatprep.subr.mxu0 0.0
    %143 = vmatpush1.msra.mxu0 0.0
    %144 = vmatprep.subr.mxu0 0.0
    %145 = vmatpush1.msra.mxu0 0.0
    %146 = vmatprep.subr.mxu0 0.0
    %147 = vmatpush1.msra.mxu0 0.0
    %148 = vmatprep.subr.mxu0 0.0
    %149 = vmatpush1.msra.mxu0 0.0
    %150 = vmatprep.subr.mxu0 0.0
    %151 = vmatpush1.msra.mxu0 0.0
    %152 = vmatprep.subr.mxu0 0.0
    %153 = vmatpush1.msra.mxu0 0.0
    %154 = vmatprep.subr.mxu0 0.0
    %155 = vmatpush1.msra.mxu0 0.0
    %156 = vmatprep.subr.mxu0 0.0
    %157 = vmatpush1.msra.mxu0 0.0
    %158 = vmatprep.subr.mxu0 0.0
    %159 = vmatpush1.msra.mxu0 0.0
    %160 = vmatprep.subr.mxu0 0.0
    %161 = vmatpush1.msra.mxu0 0.0
    %162 = vmatprep.subr.mxu0 0.0
    %163 = vmatpush1.msra.mxu0 0.0
    %164 = vmatprep.subr.mxu0 0.0
    %165 = vmatpush1.msra.mxu0 0.0
    %166 = vmatprep.subr.mxu0 0.0
    %167 = vmatpush1.msra.mxu0 0.0
    %168 = vmatprep.subr.mxu0 0.0
    %169 = vmatpush1.msra.mxu0 0.0
    %170 = vmatprep.subr.mxu0 0.0
    %171 = vmatpush1.msra.mxu0 0.0
    %172 = vmatprep.subr.mxu0 0.0
    %173 = vmatpush1.msra.mxu0 0.0
    %174 = vmatprep.subr.mxu0 0.0
    %175 = vmatpush1.msra.mxu0 0.0
    %176 = vmatprep.subr.mxu0 0.0
    %177 = vmatpush1.msra.mxu0 0.0
    %178 = vmatprep.subr.mxu0 0.0
    %179 = vmatpush1.msra.mxu0 0.0
    %180 = vmatprep.subr.mxu0 0.0
    %181 = vmatpush1.msra.mxu0 0.0
    %182 = vmatprep.subr.mxu0 0.0
    %183 = vmatpush1.msra.mxu0 0.0
    %184 = vmatprep.subr.mxu0 0.0
    %185 = vmatpush1.msra.mxu0 0.0
    %186 = vmatprep.subr.mxu0 0.0
    %187 = vmatpush1.msra.mxu0 0.0
    %188 = vmatprep.subr.mxu0 0.0
    %189 = vmatpush1.msra.mxu0 0.0
    %190 = vmatprep.subr.mxu0 0.0
    %191 = vmatpush1.msra.mxu0 0.0
    %192 = vmatprep.mubr.f32.mxu0 0.0
    %193 = vmatmul.mubr.f32.gmra.mrb[0].mxu0 %v81
    %v194 = vpop.f32.mrb[0].mxu0
    %v195 = vadd.f32 %v45, %v194
    %v196 = vpop.f32.mrb[0].mxu0
    %197 = vmatprep.mubr.f32.mxu0 0.0
    %198 = vmatmul.mubr.f32.gmra.mrb[0].mxu0 %v84
    %v199 = vpop.f32.mrb[0].mxu0
    %v200 = vadd.f32 %v45, %v199
    %v201 = vpop.f32.mrb[0].mxu0
    %202 = vmatprep.mubr.f32.mxu0 0.0
    %203 = vmatmul.mubr.f32.gmra.mrb[0].mxu0 %v87
    %v204 = vpop.f32.mrb[0].mxu0
    %v205 = vadd.f32 %v45, %v204
    %v206 = vpop.f32.mrb[0].mxu0
    %207 = vmatprep.mubr.f32.mxu0 0.0
    %208 = vmatmul.mubr.f32.gmra.mrb[0].mxu0 %v90
    %v209 = vpop.f32.mrb[0].mxu0
    %v210 = vadd.f32 %v45, %v209
    %v211 = vpop.f32.mrb[0].mxu0
    %212 = vmatprep.mubr.f32.mxu0 0.0
    %213 = vmatmul.mubr.f32.gmra.mrb[0].mxu0 %v93
    %v214 = vpop.f32.mrb[0].mxu0
    %v215 = vadd.f32 %v45, %v214
    %v216 = vpop.f32.mrb[0].mxu0
    %217 = vmatprep.mubr.f32.mxu0 0.0
    %218 = vmatmul.mubr.f32.gmra.mrb[0].mxu0 %v96
    %v219 = vpop.f32.mrb[0].mxu0
    %v220 = vadd.f32 %v45, %v219
    %v221 = vpop.f32.mrb[0].mxu0
    %222 = vmatprep.mubr.f32.mxu0 0.0
    %223 = vmatmul.mubr.f32.gmra.mrb[0].mxu0 %v99
    %v224 = vpop.f32.mrb[0].mxu0
    %v225 = vadd.f32 %v45, %v224
    %v226 = vpop.f32.mrb[0].mxu0
    %227 = vmatprep.mubr.f32.mxu0 0.0
    %228 = vmatmul.mubr.f32.gmra.mrb[0].mxu0 %v102
    %v229 = vpop.f32.mrb[0].mxu0
    %v230 = vadd.f32 %v45, %v229
    %v231 = vpop.f32.mrb[0].mxu0
    %232 = vmatprep.mubr.f32.mxu0 0.0
    %233 = vmatmul.mubr.f32.gmra.mrb[0].mxu0 %v105
    %v234 = vpop.f32.mrb[0].mxu0
    %v235 = vadd.f32 %v45, %v234
    %v236 = vpop.f32.mrb[0].mxu0
    %237 = vmatprep.mubr.f32.mxu0 0.0
    %238 = vmatmul.mubr.f32.gmra.mrb[0].mxu0 %v108
    %v239 = vpop.f32.mrb[0].mxu0
    %v240 = vadd.f32 %v45, %v239
    %v241 = vpop.f32.mrb[0].mxu0
    %242 = vmatprep.mubr.f32.mxu0 0.0
    %243 = vmatmul.mubr.f32.gmra.mrb[0].mxu0 %v111
    %v244 = vpop.f32.mrb[0].mxu0
    %v245 = vadd.f32 %v45, %v244
    %v246 = vpop.f32.mrb[0].mxu0
    %247 = vmatprep.mubr.f32.mxu0 0.0
    %248 = vmatmul.mubr.f32.gmra.mrb[0].mxu0 %v114
    %v249 = vpop.f32.mrb[0].mxu0
    %v250 = vadd.f32 %v45, %v249
    %v251 = vpop.f32.mrb[0].mxu0
    %252 = vmatprep.mubr.f32.mxu0 0.0
    %253 = vmatmul.mubr.f32.gmra.mrb[0].mxu0 %v117
    %v254 = vpop.f32.mrb[0].mxu0
    %v255 = vadd.f32 %v45, %v254
    %v256 = vpop.f32.mrb[0].mxu0
    %257 = vmatprep.mubr.f32.mxu0 0.0
    %258 = vmatmul.mubr.f32.gmra.mrb[0].mxu0 %v120
    %v259 = vpop.f32.mrb[0].mxu0
    %v260 = vadd.f32 %v45, %v259
    %v261 = vpop.f32.mrb[0].mxu0
    %262 = vmatprep.mubr.f32.mxu0 0.0
    %263 = vmatmul.mubr.f32.gmra.mrb[0].mxu0 %v123
    %v264 = vpop.f32.mrb[0].mxu0
    %v265 = vadd.f32 %v45, %v264
    %v266 = vpop.f32.mrb[0].mxu0
    %267 = vmatprep.mubr.f32.mxu0 0.0
    %268 = vmatmul.mubr.f32.gmra.mrb[0].mxu0 %v126
    %v269 = vpop.f32.mrb[0].mxu0
    %v270 = vadd.f32 %v45, %v269
    %v271 = vpop.f32.mrb[0].mxu0
    %272 = vdwg.mxu0
    %v273 = vmax.f32 %v195, 0.0
    %v274 = vmax.f32 %v200, 0.0
    %v275 = vmax.f32 %v205, 0.0
    %v276 = vmax.f32 %v210, 0.0
    %v277 = vmax.f32 %v215, 0.0
    %v278 = vmax.f32 %v220, 0.0
    %v279 = vmax.f32 %v225, 0.0
    %v280 = vmax.f32 %v230, 0.0
    %v281 = vmax.f32 %v235, 0.0
    %v282 = vmax.f32 %v240, 0.0
    %v283 = vmax.f32 %v245, 0.0
    %v284 = vmax.f32 %v250, 0.0
    %v285 = vmax.f32 %v255, 0.0
    %v286 = vmax.f32 %v260, 0.0
    %v287 = vmax.f32 %v265, 0.0
    %v288 = vmax.f32 %v270, 0.0
    %vm289 = vcmask 523264
    %290 = vst.msk [vmem:[%s3] sm:$0xff] %vm289, %v273
    %291 = vst.msk [vmem:[%s3 + $0x8] sm:$0xff] %vm289, %v274
    %292 = vst.msk [vmem:[%s3 + $0x10] sm:$0xff] %vm289, %v275
    %293 = vst.msk [vmem:[%s3 + $0x18] sm:$0xff] %vm289, %v276
    %294 = vst.msk [vmem:[%s3 + $0x20] sm:$0xff] %vm289, %v277
    %295 = vst.msk [vmem:[%s3 + $0x28] sm:$0xff] %vm289, %v278
    %296 = vst.msk [vmem:[%s3 + $0x30] sm:$0xff] %vm289, %v279
    %297 = vst.msk [vmem:[%s3 + $0x38] sm:$0xff] %vm289, %v280
    %298 = vst.msk [vmem:[%s3 + $0x40] sm:$0xff] %vm289, %v281
    %299 = vst.msk [vmem:[%s3 + $0x48] sm:$0xff] %vm289, %v282
    %300 = vst.msk [vmem:[%s3 + $0x50] sm:$0xff] %vm289, %v283
    %301 = vst.msk [vmem:[%s3 + $0x58] sm:$0xff] %vm289, %v284
    %302 = vst.msk [vmem:[%s3 + $0x60] sm:$0xff] %vm289, %v285
    %303 = vst.msk [vmem:[%s3 + $0x68] sm:$0xff] %vm289, %v286
    %304 = vst.msk [vmem:[%s3 + $0x70] sm:$0xff] %vm289, %v287
    %305 = vst.msk [vmem:[%s3 + $0x78] sm:$0xff] %vm289, %v288
    // Predicated region
    $region22: #{tpu_custom_call.1} parent=1 // pred_check
      _
    $region23: #{tpu_custom_call.1} parent=1 // pred_check_branch
      %307 = sbr.rel (0) target = $region25
    $region24: #{tpu_custom_call.1} parent=1 // pred_region
      _
    $region25: #{tpu_custom_call.1} parent=1 // pred_fallthru
      _
    // Predicated region
    $region26: #{tpu_custom_call.1} parent=1 // pred_check
      _
    $region27: #{tpu_custom_call.1} parent=1 // pred_check_branch
      %309 = sbr.rel (0) target = $region29
    $region28: #{tpu_custom_call.1} parent=1 // pred_region
      _
    $region29: #{tpu_custom_call.1} parent=1 // pred_fallthru
      _
    %310 = vsyncpa [#allocation3], 1
    %311 = vsyncpa [#allocation5], 1

</llo_original>
